<compile_context>
chip_gen: v7x
topology: tpu7x:2x2x1
jax: 0.10.0
libtpu: 0.0.40
codegen_flags: <defaults>
</compile_context>

<pallas_src>
import jax
import jax.numpy as jnp
from jax.experimental import pallas as pl
from jax.experimental.pallas import tpu as pltpu


# ----------------------------------------------------------------------------
# Kernel: one (batch-tile i, hidden-tile j) grid step.
# ----------------------------------------------------------------------------
def _net_kernel(x_ref, w1_ref, b1_ref, y_ref, h_ref, acc_ref):
    # x_ref  : (TB, Dp_in)  batch tile of the input, compute dtype
    # w1_ref : (TH, Dp_in)  tile of fc1.weight (PyTorch layout), compute dtype
    # b1_ref : (1, TH)      tile of fc1.bias, float32
    # y_ref  : (TB, Dp_in)  output X  = sigmoid(X1 @ W1)   (revisited over j)
    # h_ref  : (TB, TH)     output X1 = sigmoid(X @ W1^T + b1)
    # acc_ref: (TB, Dp_in)  f32 accumulator for the tied second matmul
    j = pl.program_id(1)

    @pl.when(j == 0)
    def _init():
        acc_ref[...] = jnp.zeros_like(acc_ref)

    x = x_ref[...]
    w1 = w1_ref[...]

    # fc1: contract x's feature axis against W1's last axis (== x @ W1^T).
    # No transpose is materialized; the MXU accumulates in f32.
    acc1 = jax.lax.dot_general(
        x, w1,
        dimension_numbers=(((1,), (1,)), ((), ())),
        preferred_element_type=jnp.float32,
    )
    h = jax.nn.sigmoid(acc1 + b1_ref[...])       # bias add + sigmoid in f32
    h_ref[...] = h.astype(h_ref.dtype)

    # fc2 (tied weights, no bias): this hidden tile's contribution of X1 @ W1,
    # contracting W1's first (hidden) axis; accumulate in f32.
    acc_ref[...] += jax.lax.dot_general(
        h.astype(w1.dtype), w1,
        dimension_numbers=(((1,), (0,)), ((), ())),
        preferred_element_type=jnp.float32,
    )

    @pl.when(j == pl.num_programs(1) - 1)
    def _finalize():
        y_ref[...] = jax.nn.sigmoid(acc_ref[...]).astype(y_ref.dtype)


# ----------------------------------------------------------------------------
# Helpers
# ----------------------------------------------------------------------------
def _round_up(v, m):
    return (v + m - 1) // m * m


def _sublane_multiple(dtype):
    # f32 -> 8 sublanes, bf16 -> 16 (packed pairs), int8/fp8 -> 32.
    return max(8, 32 // jnp.dtype(dtype).itemsize)


def _default_vmem_limit_bytes():
    # 7/8 of physical per-core VMEM (leaves headroom for Mosaic internal
    # scratch):  v5e/v6e 128 MiB -> 112 MiB,  v7x 64 MiB -> 56 MiB.
    try:
        phys = int(pltpu.get_tpu_info().vmem_capacity_bytes)
    except Exception:
        phys = 64 * 1024 * 1024          # conservative fallback (v7x size)
    return int(min(max((phys * 7) // 8, 32 * 1024 * 1024), 120 * 1024 * 1024))


_BUFFERED1_OK = None


def _single_buffer_supported():
    """Probe once whether pipeline_mode=pl.Buffered(1) lowers on this build."""
    global _BUFFERED1_OK
    if _BUFFERED1_OK is not None:
        return _BUFFERED1_OK

    def _copy(x_ref, o_ref):
        o_ref[...] = x_ref[...]

    try:
        spec = pl.BlockSpec((8, 128), lambda i: (0, 0),
                            pipeline_mode=pl.Buffered(1))
        out = pl.pallas_call(
            _copy,
            out_shape=jax.ShapeDtypeStruct((8, 128), jnp.float32),
            grid=(1,),
            in_specs=[spec],
            out_specs=pl.BlockSpec((8, 128), lambda i: (0, 0)),
        )(jnp.zeros((8, 128), jnp.float32))
        jax.block_until_ready(out)
        _BUFFERED1_OK = True
    except Exception:
        _BUFFERED1_OK = False
    return _BUFFERED1_OK


# ----------------------------------------------------------------------------
# Forward-pass factory
# ----------------------------------------------------------------------------
def make_net_forward(w1, b1, *, compute_dtype=jnp.bfloat16, tb_max=256,
                     vmem_limit_bytes=None, w1_tile_budget_bytes=None):
    """Build forward(x) -> (X, X1) for Net with fc1.weight=w1, fc1.bias=b1.

    Weights are padded to lane-dense multiples of 128 and cast to the MXU
    compute dtype ONCE here (not on every forward call).  Zero padding is
    semantics-preserving: padded hidden columns of X1 evaluate to 0.5 but
    multiply all-zero padded W1 rows in the tied matmul, and padded outputs
    are sliced off before returning.
    """
    hidden_num, input_dim = w1.shape
    assert b1.shape == (hidden_num,), "fc1.bias must be (HiddenNum,)"

    d_in = _round_up(input_dim, 128)
    d_h = _round_up(hidden_num, 128)
    itemsize = jnp.dtype(compute_dtype).itemsize

    w1p = jnp.pad(w1, ((0, d_h - hidden_num), (0, d_in - input_dim))).astype(compute_dtype)
    b1p = jnp.pad(b1, (0, d_h - hidden_num)).astype(jnp.float32).reshape(1, d_h)

    vmem_limit = int(vmem_limit_bytes or _default_vmem_limit_bytes())

    # Hidden-dim tiling: keep W1 fully resident when it fits a ~40%-of-VMEM
    # budget, otherwise stream double-buffered (th, d_in) tiles over grid
    # axis 1 (the N dim of matmul1, the K dim of matmul2).
    w1_budget = int(w1_tile_budget_bytes or
                    max(2 * 128 * d_in * itemsize, (vmem_limit * 2) // 5))
    if d_h * d_in * itemsize <= w1_budget:
        th = d_h
    else:
        th = max(128, (w1_budget // (2 * d_in * itemsize)) // 128 * 128)
        th = min(th, d_h)
        while d_h % th:          # keep th a 128-multiple divisor of d_h
            th -= 128
    n_h = d_h // th

    # Resident (never re-fetched) weight/bias -> single pipeline buffer where
    # supported; streamed weight keeps default double buffering.
    if n_h == 1 and _single_buffer_supported():
        w1_spec = pl.BlockSpec((th, d_in), lambda i, j: (j, 0),
                               pipeline_mode=pl.Buffered(1))
        b1_spec = pl.BlockSpec((1, th), lambda i, j: (0, j),
                               pipeline_mode=pl.Buffered(1))
    else:
        w1_spec = pl.BlockSpec((th, d_in), lambda i, j: (j, 0))
        b1_spec = pl.BlockSpec((1, th), lambda i, j: (0, j))

    sub = _sublane_multiple(compute_dtype)

    @jax.jit
    def _fwd(x, w1_pad, b1_pad):
        B, in_dim = x.shape
        if in_dim != input_dim:
            raise ValueError("x feature dim does not match fc1.weight")
        out_dtype = x.dtype

        tb = _round_up(min(tb_max, _round_up(B, sub)), sub)
        b_pad = _round_up(B, tb)
        xp = jnp.pad(x, ((0, b_pad - B), (0, d_in - input_dim))).astype(compute_dtype)

        grid = (b_pad // tb, n_h)
        out_shapes = (
            jax.ShapeDtypeStruct((b_pad, d_in), out_dtype),   # X
            jax.ShapeDtypeStruct((b_pad, d_h), out_dtype),    # X1
        )

        y_p, h_p = pl.pallas_call(
            _net_kernel,
            out_shape=out_shapes,
            grid_spec=pltpu.PrefetchScalarGridSpec(
                num_scalar_prefetch=0,
                grid=grid,
                in_specs=[
                    pl.BlockSpec((tb, d_in), lambda i, j: (i, 0)),   # x batch tile
                    w1_spec,                                         # W1 tile
                    b1_spec,                                         # b1 tile
                ],
                out_specs=[
                    pl.BlockSpec((tb, d_in), lambda i, j: (i, 0)),   # X (revisit over j)
                    pl.BlockSpec((tb, th), lambda i, j: (i, j)),     # X1
                ],
                scratch_shapes=[pltpu.VMEM((tb, d_in), jnp.float32)],
            ),
            compiler_params=pltpu.CompilerParams(
                dimension_semantics=("parallel", "arbitrary"),
                vmem_limit_bytes=vmem_limit,
            ),
        )(xp, w1_pad, b1_pad)

        # Strip padding.
        return y_p[:B, :input_dim], h_p[:B, :hidden_num]

    def forward(x):
        return _fwd(x, w1p, b1p)

    return forward


def net_forward(x, w1, b1, **kwargs):
    """One-shot convenience wrapper (prefer make_net_forward for repeated calls)."""
    return make_net_forward(w1, b1, **kwargs)(x)


# ----------------------------------------------------------------------------
# Reference + self-test
# ----------------------------------------------------------------------------
def _reference(x, w1, b1):
    h = jax.nn.sigmoid(x @ w1.T + b1[None, :])
    y = jax.nn.sigmoid(h @ w1)
    return y, h


if __name__ == "__main__":
    key = jax.random.PRNGKey(0)

    # ---- Case 1: Net(InputDim=16, HiddenNum=32); tied fc2 => OutputDim=16 ----
    B, IN_DIM, HID = 8, 16, 32
    kx, kw, kb, key = jax.random.split(key, 4)
    bound = 1.0 / (IN_DIM ** 0.5)            # nn.Linear default init range
    x = jax.random.normal(kx, (B, IN_DIM), jnp.float32)
    w1 = jax.random.uniform(kw, (HID, IN_DIM), jnp.float32, -bound, bound)
    b1 = jax.random.uniform(kb, (HID,), jnp.float32, -bound, bound)
    y_ref, h_ref = _reference(x, w1, b1)

    # Default path: bf16 MXU operands, f32 accumulation / bias / sigmoid.
    fwd = make_net_forward(w1, b1)
    y, h = fwd(x)
    jax.block_until_ready((y, h))
    assert y.shape == (B, IN_DIM) and h.shape == (B, HID)
    assert jnp.allclose(y, y_ref, atol=3e-2), "fc2 output mismatch (bf16)"
    assert jnp.allclose(h, h_ref, atol=3e-2), "fc1 output mismatch (bf16)"

    # Exact-semantics f32 path.
    fwd32 = make_net_forward(w1, b1, compute_dtype=jnp.float32)
    y32, h32 = fwd32(x)
    jax.block_until_ready((y32, h32))
    assert jnp.allclose(y32, y_ref, atol=1e-5), "fc2 output mismatch (f32)"
    assert jnp.allclose(h32, h_ref, atol=1e-5), "fc1 output mismatch (f32)"

    # ---- Case 2: force the multi-tile path (3 batch tiles x 3 hidden tiles,
    #              exercising the f32 VMEM accumulator / pl.when finalize) ----
    B2, IN2, HID2 = 40, 16, 300
    kx, kw, kb, key = jax.random.split(key, 4)
    bound2 = 1.0 / (IN2 ** 0.5)
    x2 = jax.random.normal(kx, (B2, IN2), jnp.float32)
    w2 = jax.random.uniform(kw, (HID2, IN2), jnp.float32, -bound2, bound2)
    b2 = jax.random.uniform(kb, (HID2,), jnp.float32, -bound2, bound2)
    y2_ref, h2_ref = _reference(x2, w2, b2)

    fwd_tiled = make_net_forward(
        w2, b2, tb_max=16,
        w1_tile_budget_bytes=64 * 1024,   # forces 128-row hidden tiles (3 tiles)
    )
    y2, h2 = fwd_tiled(x2)
    jax.block_until_ready((y2, h2))
    assert y2.shape == (B2, IN2) and h2.shape == (B2, HID2)
    assert jnp.allclose(y2, y2_ref, atol=3e-2), "fc2 output mismatch (tiled bf16)"
    assert jnp.allclose(h2, h2_ref, atol=3e-2), "fc1 output mismatch (tiled bf16)"

    print("KERNEL_OK")
</pallas_src>

<mosaic_0001>
module attributes {stable_mosaic.version = 11 : i64} {
  func.func @_copy(%arg0: i32, %arg1: memref<8x128xf32, #tpu.memory_space<vmem>>, %arg2: memref<8x128xf32, #tpu.memory_space<vmem>>) attributes {dimension_semantics = [#tpu.dimension_semantics<arbitrary>], iteration_bounds = array<i64: 1>, scalar_prefetch = 0 : i64, scratch_operands = 0 : i64, tpu.core_type = #tpu.core_type<tc>, window_params = [{pipeline_mode = #tpu.pipeline_mode<synchronous>, transform_indices = @transform_0, window_bounds = array<i64: 8, 128>}, {pipeline_mode = #tpu.pipeline_mode<synchronous>, transform_indices = @transform_1, window_bounds = array<i64: 8, 128>}]} {
    %c0 = arith.constant 0 : index
    %c0_0 = arith.constant 0 : index
    %0 = vector.load %arg1[%c0, %c0_0] : memref<8x128xf32, #tpu.memory_space<vmem>>, vector<8x128xf32>
    %c0_1 = arith.constant 0 : index
    %c0_2 = arith.constant 0 : index
    %1 = vector.load %arg2[%c0_1, %c0_2] : memref<8x128xf32, #tpu.memory_space<vmem>>, vector<8x128xf32>
    tpu.vector_store %arg2[%c0_1, %c0_2], %0 {strides = array<i32>} : memref<8x128xf32, #tpu.memory_space<vmem>>, vector<8x128xf32>,
    return
  }
  func.func @transform_0(%arg0: i32) -> (i32, i32) {
    %c0_i32 = arith.constant 0 : i32
    %c0_i32_0 = arith.constant 0 : i32
    %c0_i32_1 = arith.constant 0 : i32
    return %c0_i32, %c0_i32_0 : i32, i32
  }
  func.func @transform_1(%arg0: i32) -> (i32, i32) {
    %c0_i32 = arith.constant 0 : i32
    %c0_i32_0 = arith.constant 0 : i32
    %c0_i32_1 = arith.constant 0 : i32
    return %c0_i32, %c0_i32_0 : i32, i32
  }
}

module attributes {stable_mosaic.version = 11 : i64} {
  func.func @_net_kernel(%arg0: i32, %arg1: i32, %arg2: memref<16x128xbf16, #tpu.memory_space<vmem>>, %arg3: memref<128x128xbf16, #tpu.memory_space<vmem>>, %arg4: memref<1x128xf32, #tpu.memory_space<vmem>>, %arg5: memref<16x128xf32, #tpu.memory_space<vmem>>, %arg6: memref<16x128xf32, #tpu.memory_space<vmem>>, %arg7: memref<16x128xf32, #tpu.memory_space<vmem>>) attributes {dimension_semantics = [#tpu.dimension_semantics<parallel>, #tpu.dimension_semantics<arbitrary>], iteration_bounds = array<i64: 1, 1>, scalar_prefetch = 0 : i64, scratch_operands = 1 : i64, tpu.core_type = #tpu.core_type<tc>, window_params = [{transform_indices = @transform_0, window_bounds = array<i64: 16, 128>}, {transform_indices = @transform_1, window_bounds = array<i64: 128, 128>}, {transform_indices = @transform_2, window_bounds = array<i64: 1, 128>}, {transform_indices = @transform_3, window_bounds = array<i64: 16, 128>}, {transform_indices = @transform_4, window_bounds = array<i64: 16, 128>}]} {
    %c0_i32 = arith.constant 0 : i32
    %0 = arith.cmpi eq, %arg1, %c0_i32 : i32
    %1 = arith.extui %0 : i1 to i32
    %c0_i32_0 = arith.constant 0 : i32
    %2 = arith.cmpi ne, %1, %c0_i32_0 : i32
    scf.if %2 {
      %cst_16 = arith.constant 0.000000e+00 : f32
      %23 = vector.broadcast %cst_16 : f32 to vector<16x128xf32>
      %c0_17 = arith.constant 0 : index
      %c0_18 = arith.constant 0 : index
      %24 = vector.load %arg7[%c0_17, %c0_18] : memref<16x128xf32, #tpu.memory_space<vmem>>, vector<16x128xf32>
      tpu.vector_store %arg7[%c0_17, %c0_18], %23 {strides = array<i32>} : memref<16x128xf32, #tpu.memory_space<vmem>>, vector<16x128xf32>,
    } else {
    }
    %c0 = arith.constant 0 : index
    %c0_1 = arith.constant 0 : index
    %3 = vector.load %arg2[%c0, %c0_1] : memref<16x128xbf16, #tpu.memory_space<vmem>>, vector<16x128xbf16>
    %c0_2 = arith.constant 0 : index
    %c0_3 = arith.constant 0 : index
    %4 = vector.load %arg3[%c0_2, %c0_3] : memref<128x128xbf16, #tpu.memory_space<vmem>>, vector<128x128xbf16>
    %cst = arith.constant dense<0.000000e+00> : vector<16x128xf32>
    %5 = tpu.matmul %3, %4, %cst {dimension_numbers = #tpu.dot_dimension_numbers<[1], [1], [0], [0], [0, 0, 1, 0], [], []>} : vector<16x128xbf16>, vector<128x128xbf16>, vector<16x128xf32> -> vector<16x128xf32>
    %c0_4 = arith.constant 0 : index
    %c0_5 = arith.constant 0 : index
    %6 = vector.load %arg4[%c0_4, %c0_5] : memref<1x128xf32, #tpu.memory_space<vmem>>, vector<1x128xf32>
    %7 = vector.broadcast %6 : vector<1x128xf32> to vector<16x128xf32>
    %8 = arith.addf %5, %7 : vector<16x128xf32>
    %9 = arith.negf %8 : vector<16x128xf32>
    %10 = math.exp %9 : vector<16x128xf32>
    %cst_6 = arith.constant 1.000000e+00 : f32
    %11 = vector.broadcast %cst_6 : f32 to vector<16x128xf32>
    %12 = arith.addf %11, %10 : vector<16x128xf32>
    %13 = arith.divf %11, %12 : vector<16x128xf32>
    %c0_7 = arith.constant 0 : index
    %c0_8 = arith.constant 0 : index
    %14 = vector.load %arg6[%c0_7, %c0_8] : memref<16x128xf32, #tpu.memory_space<vmem>>, vector<16x128xf32>
    tpu.vector_store %arg6[%c0_7, %c0_8], %13 {strides = array<i32>} : memref<16x128xf32, #tpu.memory_space<vmem>>, vector<16x128xf32>,
    %c0_9 = arith.constant 0 : index
    %c0_10 = arith.constant 0 : index
    %15 = vector.load %arg7[%c0_9, %c0_10] : memref<16x128xf32, #tpu.memory_space<vmem>>, vector<16x128xf32>
    %16 = arith.truncf %13 : vector<16x128xf32> to vector<16x128xbf16>
    %cst_11 = arith.constant dense<0.000000e+00> : vector<16x128xf32>
    %17 = tpu.matmul %16, %4, %cst_11 {dimension_numbers = #tpu.dot_dimension_numbers<[1], [0], [0], [1], [0, 0, 1, 1], [], []>} : vector<16x128xbf16>, vector<128x128xbf16>, vector<16x128xf32> -> vector<16x128xf32>
    %18 = arith.addf %15, %17 : vector<16x128xf32>
    %c0_12 = arith.constant 0 : index
    %c0_13 = arith.constant 0 : index
    %19 = vector.load %arg7[%c0_12, %c0_13] : memref<16x128xf32, #tpu.memory_space<vmem>>, vector<16x128xf32>
    tpu.vector_store %arg7[%c0_12, %c0_13], %18 {strides = array<i32>} : memref<16x128xf32, #tpu.memory_space<vmem>>, vector<16x128xf32>,
    %c0_i32_14 = arith.constant 0 : i32
    %20 = arith.cmpi eq, %arg1, %c0_i32_14 : i32
    %21 = arith.extui %20 : i1 to i32
    %c0_i32_15 = arith.constant 0 : i32
    %22 = arith.cmpi ne, %21, %c0_i32_15 : i32
    scf.if %22 {
      %c0_16 = arith.constant 0 : index
      %c0_17 = arith.constant 0 : index
      %23 = vector.load %arg7[%c0_16, %c0_17] : memref<16x128xf32, #tpu.memory_space<vmem>>, vector<16x128xf32>
      %24 = arith.negf %23 : vector<16x128xf32>
      %25 = math.exp %24 : vector<16x128xf32>
      %cst_18 = arith.constant 1.000000e+00 : f32
      %26 = vector.broadcast %cst_18 : f32 to vector<16x128xf32>
      %27 = arith.addf %26, %25 : vector<16x128xf32>
      %28 = arith.divf %26, %27 : vector<16x128xf32>
      %c0_19 = arith.constant 0 : index
      %c0_20 = arith.constant 0 : index
      %29 = vector.load %arg5[%c0_19, %c0_20] : memref<16x128xf32, #tpu.memory_space<vmem>>, vector<16x128xf32>
      tpu.vector_store %arg5[%c0_19, %c0_20], %28 {strides = array<i32>} : memref<16x128xf32, #tpu.memory_space<vmem>>, vector<16x128xf32>,
    } else {
    }
    return
  }
  func.func @transform_0(%arg0: i32, %arg1: i32) -> (i32, i32) {
    %c0_i32 = arith.constant 0 : i32
    %c0_i32_0 = arith.constant 0 : i32
    return %arg0, %c0_i32 : i32, i32
  }
  func.func @transform_1(%arg0: i32, %arg1: i32) -> (i32, i32) {
    %c0_i32 = arith.constant 0 : i32
    %c0_i32_0 = arith.constant 0 : i32
    return %arg1, %c0_i32 : i32, i32
  }
  func.func @transform_2(%arg0: i32, %arg1: i32) -> (i32, i32) {
    %c0_i32 = arith.constant 0 : i32
    %c0_i32_0 = arith.constant 0 : i32
    return %c0_i32, %arg1 : i32, i32
  }
  func.func @transform_3(%arg0: i32, %arg1: i32) -> (i32, i32) {
    %c0_i32 = arith.constant 0 : i32
    %c0_i32_0 = arith.constant 0 : i32
    return %arg0, %c0_i32 : i32, i32
  }
  func.func @transform_4(%arg0: i32, %arg1: i32) -> (i32, i32) {
    %c0_i32 = arith.constant 0 : i32
    return %arg0, %arg1 : i32, i32
  }
}

</mosaic_0001>

<llo_original>
// kernel: tpu_custom_call.1
$region0: #{tpu_custom_call.1}
  #allocation0 [shape = 'u32[]', space=smem, size = 0x4, offset = 0x4, fixed_abs, tag = 'smem constant byte address 0x4 - core index']
  #allocation1 [shape = 'u32[144,128]{1,0:T(1,128)}', space=vmem, size = 0x12000, scoped, tag = 'internal scratch']
  %s0 = inlined_call_operand.hbm [shape: f32[8,128], index: 0, kind: input, shape index: {}]
  %s1 = inlined_call_operand.hbm [shape: f32[8,128], index: 1, kind: output, shape index: {}]
  %s2 = sld [smem:[#allocation0]]
  $region18: #{tpu_custom_call.1} parent=0
    _
  %s4 = ssub.s32 1, %s2
  %s5 = scalar_select 0, %s4, %s2
  $region1: #{tpu_custom_call.1} parent=0
    #allocation2 [shape = 'u8[4096]{0}', space=vmem, size = 0x1000, scoped, tag = 'input window, operand 0, single buffered']
    #allocation3 [shape = 's32[1]{0}', space=sflag, size = 0x4, scoped, tag = 'scoped memory for tpu_custom_call.1']
    #allocation4 [shape = 's32[1]{0}', space=sflag, size = 0x4, scoped, tag = 'scoped memory for tpu_custom_call.1']
    #allocation5 [shape = 'u8[4096]{0}', space=vmem, size = 0x1000, scoped, tag = 'output window, operand 0, single buffered']
    %6 = vsyncpa [#allocation3], 0
    %7 = vsyncpa [#allocation4], 0
    // Predicated region
    $region2: #{tpu_custom_call.1} parent=1 // pred_check
      _
    $region3: #{tpu_custom_call.1} parent=1 // pred_check_branch
      %9 = sbr.rel (0) target = $region5
    $region4: #{tpu_custom_call.1} parent=1 // pred_region
      %s11 = ssub.s32 128, 128
      %12 = vsyncadd [#allocation3], %s11
      %s14 = sshll.u32 [#allocation2], 4
      %s15 = int_to_ptr.vmem [resolvable:$true] %s14
      %17 = dma.hbm_to_vmem [thread:$0]  %s0, 128, %s15, [#allocation3]
    $region5: #{tpu_custom_call.1} parent=1 // pred_fallthru
      _
    // Predicated region
    $region6: #{tpu_custom_call.1} parent=1 // pred_check
      _
    $region7: #{tpu_custom_call.1} parent=1 // pred_check_branch
      %19 = sbr.rel (0) target = $region9
    $region8: #{tpu_custom_call.1} parent=1 // pred_region
      %20 = dma.done [#allocation3], 128
    $region9: #{tpu_custom_call.1} parent=1 // pred_fallthru
      _
    %v21 = vld [vmem:[#allocation2] sm:$0xff]
    %22 = vst [vmem:[#allocation5] sm:$0xff] %v21
    // Predicated region
    $region10: #{tpu_custom_call.1} parent=1 // pred_check
      _
    $region11: #{tpu_custom_call.1} parent=1 // pred_check_branch
      %24 = sbr.rel (0) target = $region13
    $region12: #{tpu_custom_call.1} parent=1 // pred_region
      %s26 = ssub.s32 128, 128
      %27 = vsyncadd [#allocation4], %s26
      %s29 = sshll.u32 [#allocation5], 4
      %s30 = int_to_ptr.vmem [resolvable:$true] %s29
      %32 = dma.vmem_to_hbm [thread:$0]  %s30, 128, %s1, [#allocation4]
    $region13: #{tpu_custom_call.1} parent=1 // pred_fallthru
      _
    // Predicated region
    $region14: #{tpu_custom_call.1} parent=1 // pred_check
      _
    $region15: #{tpu_custom_call.1} parent=1 // pred_check_branch
      %34 = sbr.rel (0) target = $region17
    $region16: #{tpu_custom_call.1} parent=1 // pred_region
      %35 = dma.done [#allocation4], 128
    $region17: #{tpu_custom_call.1} parent=1 // pred_fallthru
      _
    %36 = vsyncpa [#allocation3], 1
    %37 = vsyncpa [#allocation4], 1

// kernel: _fwd.1
$region0: #{_fwd.1}
  #allocation0 [shape = 'u32[]', space=smem, size = 0x4, offset = 0x4, fixed_abs, tag = 'smem constant byte address 0x4 - core index']
  #allocation1 [shape = 'u32[144,128]{1,0:T(1,128)}', space=vmem, size = 0x12000, scoped, tag = 'internal scratch']
  #allocation2 [shape = 'f32[16,128]{1,0:T(8,128)}', space=vmem, size = 0x2000, scoped, tag = 'scratch operand']
  %s0 = inlined_call_operand.vmem [shape: bf16[16,128], index: 0, kind: input, shape index: {}]
  %s1 = inlined_call_operand.hbm [shape: bf16[128,128], index: 1, kind: input, shape index: {}]
  %s2 = inlined_call_operand.vmem [shape: f32[1,128], index: 2, kind: input, shape index: {}]
  %s3 = inlined_call_operand.vmem [shape: f32[16,128], index: 3, kind: output, shape index: {0}]
  %s4 = inlined_call_operand.vmem [shape: f32[16,128], index: 4, kind: output, shape index: {1}]
  %5 = xla_tuple %s3, %s4
  %s6 = sld [smem:[#allocation0]]
  $region42: #{_fwd.1} parent=0
    _
  %s8 = ssub.s32 1, %s6
  %s9 = scalar_select 0, %s8, %s6
  $region1: #{_fwd.1} parent=0
    #allocation3 [shape = 'u8[32768]{0}', space=vmem, size = 0x8000, scoped, tag = 'input window, operand 1, single buffered']
    #allocation4 [shape = 's32[1]{0}', space=sflag, size = 0x4, scoped, tag = 'scoped memory for _fwd.1']
    %10 = vsyncpa [#allocation4], 0
    // Predicated region
    $region2: #{_fwd.1} parent=1 // pred_check
      _
    $region3: #{_fwd.1} parent=1 // pred_check_branch
      %12 = sbr.rel (0) target = $region5
    $region4: #{_fwd.1} parent=1 // pred_region
      _
    $region5: #{_fwd.1} parent=1 // pred_fallthru
      _
    // Predicated region
    $region6: #{_fwd.1} parent=1 // pred_check
      _
    $region7: #{_fwd.1} parent=1 // pred_check_branch
      %14 = sbr.rel (0) target = $region9
    $region8: #{_fwd.1} parent=1 // pred_region
      %s16 = ssub.s32 1024, 1024
      %17 = vsyncadd [#allocation4], %s16
      %s18 = sshll.u32 [#allocation3], 4
      %s19 = int_to_ptr.vmem [resolvable:$true] %s18
      %24 = dma.hbm_to_vmem [thread:$0]  %s1, 1024, %s19, [#allocation4], 64, 64, 4
    $region9: #{_fwd.1} parent=1 // pred_fallthru
      _
    // Predicated region
    $region10: #{_fwd.1} parent=1 // pred_check
      _
    $region11: #{_fwd.1} parent=1 // pred_check_branch
      %26 = sbr.rel (0) target = $region13
    $region12: #{_fwd.1} parent=1 // pred_region
      _
    $region13: #{_fwd.1} parent=1 // pred_fallthru
      _
    // Predicated region
    $region14: #{_fwd.1} parent=1 // pred_check
      _
    $region15: #{_fwd.1} parent=1 // pred_check_branch
      %28 = sbr.rel (0) target = $region17
    $region16: #{_fwd.1} parent=1 // pred_region
      %29 = dma.done [#allocation4], 1024
    $region17: #{_fwd.1} parent=1 // pred_fallthru
      _
    %p31 = scmp.eq.s32.totalorder 0, 0
    // Predicated region
    $region18: #{_fwd.1} parent=1 // pred_check
      %p32 = pneg %p31
    $region19: #{_fwd.1} parent=1 // pred_check_branch
      %34 = sbr.rel (%p32) target = $region21
    $region20: #{_fwd.1} parent=1 // pred_region
      %35 = vst [vmem:[#allocation2] sm:$0xff] 0.0
      %36 = vst [vmem:[#allocation2 + $0x8] sm:$0xff] 0.0
    $region21: #{_fwd.1} parent=1 // pred_fallthru
      _
    %v37 = vld [vmem:[%s0] sm:$0xf]
    %v38 = vld [vmem:[%s0 + $0x4] sm:$0xf]
    %v39 = vld [vmem:[#allocation3] sm:$0xf]
    %v40 = vld [vmem:[#allocation3 + $0x4] sm:$0xf]
    %v41 = vld [vmem:[#allocation3 + $0x8] sm:$0xf]
    %v42 = vld [vmem:[#allocation3 + $0xc] sm:$0xf]
    %v43 = vld [vmem:[#allocation3 + $0x10] sm:$0xf]
    %v44 = vld [vmem:[#allocation3 + $0x14] sm:$0xf]
    %v45 = vld [vmem:[#allocation3 + $0x18] sm:$0xf]
    %v46 = vld [vmem:[#allocation3 + $0x1c] sm:$0xf]
    %v47 = vld [vmem:[#allocation3 + $0x20] sm:$0xf]
    %v48 = vld [vmem:[#allocation3 + $0x24] sm:$0xf]
    %v49 = vld [vmem:[#allocation3 + $0x28] sm:$0xf]
    %v50 = vld [vmem:[#allocation3 + $0x2c] sm:$0xf]
    %v51 = vld [vmem:[#allocation3 + $0x30] sm:$0xf]
    %v52 = vld [vmem:[#allocation3 + $0x34] sm:$0xf]
    %v53 = vld [vmem:[#allocation3 + $0x38] sm:$0xf]
    %v54 = vld [vmem:[#allocation3 + $0x3c] sm:$0xf]
    %v55 = vld [vmem:[%s2] sm:$0x1]
    %v57 = vlaneseq
    %v58 = vshrl.u32 %v57, 7
    %v59 = vsub.s32 0, %v58
    %v60 = vrot.slane %v55, %v59
    %v64 = vunpack.c.l.b16 %v37
    %v65 = vunpack.c.l.b16 %v38
    %v66 = vpack.c.b16 %v65, %v64
    %v84 = vunpack.c.l.b16 %v39
    %v85 = vunpack.c.l.b16 %v40
    %v86 = vunpack.c.l.b16 %v41
    %v87 = vunpack.c.l.b16 %v42
    %v88 = vunpack.c.l.b16 %v43
    %v89 = vunpack.c.l.b16 %v44
    %v90 = vunpack.c.l.b16 %v45
    %v91 = vunpack.c.l.b16 %v46
    %v92 = vunpack.c.l.b16 %v47
    %v93 = vunpack.c.l.b16 %v48
    %v94 = vunpack.c.l.b16 %v49
    %v95 = vunpack.c.l.b16 %v50
    %v96 = vunpack.c.l.b16 %v51
    %v97 = vunpack.c.l.b16 %v52
    %v98 = vunpack.c.l.b16 %v53
    %v99 = vunpack.c.l.b16 %v54
    %v100 = vpack.c.b16 %v85, %v84
    %v101 = vpack.c.b16 %v87, %v86
    %v102 = vpack.c.b16 %v89, %v88
    %v103 = vpack.c.b16 %v91, %v90
    %v104 = vpack.c.b16 %v93, %v92
    %v105 = vpack.c.b16 %v95, %v94
    %v106 = vpack.c.b16 %v97, %v96
    %v107 = vpack.c.b16 %v99, %v98
    %116 = vmatprep.subr.bf16.mxu0 0
    %117 = vmatpush1.bf16.xpose.msra.mxu0 %v100
    %118 = vmatprep.subr.bf16.mxu0 0
    %119 = vmatpush1.bf16.xpose.msra.mxu0 %v101
    %120 = vmatprep.subr.bf16.mxu0 0
    %121 = vmatpush1.bf16.xpose.msra.mxu0 %v102
    %122 = vmatprep.subr.bf16.mxu0 0
    %123 = vmatpush1.bf16.xpose.msra.mxu0 %v103
    %124 = vmatprep.subr.bf16.mxu0 0
    %125 = vmatpush1.bf16.xpose.msra.mxu0 %v104
    %126 = vmatprep.subr.bf16.mxu0 0
    %127 = vmatpush1.bf16.xpose.msra.mxu0 %v105
    %128 = vmatprep.subr.bf16.mxu0 0
    %129 = vmatpush1.bf16.xpose.msra.mxu0 %v106
    %130 = vmatprep.subr.bf16.mxu0 0
    %131 = vmatpush1.bf16.xpose.msra.mxu0 %v107
    %132 = vmatprep.subr.bf16.mxu0 0
    %133 = vmatpush1.bf16.xpose.msra.mxu0 0
    %134 = vmatprep.subr.bf16.mxu0 0
    %135 = vmatpush1.bf16.xpose.msra.mxu0 0
    %136 = vmatprep.subr.bf16.mxu0 0
    %137 = vmatpush1.bf16.xpose.msra.mxu0 0
    %138 = vmatprep.subr.bf16.mxu0 0
    %139 = vmatpush1.bf16.xpose.msra.mxu0 0
    %140 = vmatprep.subr.bf16.mxu0 0
    %141 = vmatpush1.bf16.xpose.msra.mxu0 0
    %142 = vmatprep.subr.bf16.mxu0 0
    %143 = vmatpush1.bf16.xpose.msra.mxu0 0
    %144 = vmatprep.subr.bf16.mxu0 0
    %145 = vmatpush1.bf16.xpose.msra.mxu0 0
    %146 = vmatprep.subr.bf16.mxu0 0
    %147 = vmatpush1.bf16.xpose.msra.mxu0 0
    %148 = vmatprep.mubr.bf16.mxu0 0
    %149 = vmatmul.mubr.bf16.gmra.mrb[0].mxu0 %v66
    %v150 = vpop.f32.mrb[0].mxu0
    %v151 = vadd.f32 %v60, %v150
    %v152 = vpop.f32.mrb[0].mxu0
    %v153 = vpop.f32.mrb[0].mxu0
    %v154 = vadd.f32 %v60, %v153
    %v155 = vpop.f32.mrb[0].mxu0
    %156 = vdwg.mxu0
    %v157 = vxor.u32 %v151, 2147483648
    %v158 = vxor.u32 %v154, 2147483648
    %v159 = vmul.f32 %v157, 1.442695
    %v160 = vpow.pop %v159
    %v161 = vmul.f32 %v158, 1.442695
    %v162 = vpow.pop %v161
    %v163 = vadd.f32 %v160, 1.0
    %v164 = vadd.f32 %v162, 1.0
    %v165 = vrcp.pop %v163
    %v166 = vmul.f32 1.0, %v165
    %v167 = vrcp.pop %v164
    %v168 = vmul.f32 1.0, %v167
    %169 = vst [vmem:[%s4] sm:$0xff] %v166
    %170 = vst [vmem:[%s4 + $0x8] sm:$0xff] %v168
    %v171 = vld [vmem:[#allocation2] sm:$0xff]
    %v172 = vld [vmem:[#allocation2 + $0x8] sm:$0xff]
    %v173 = vpack.c.bf16 %v168, %v166
    %174 = vmatprep.subr.bf16.mxu0 0
    %175 = vmatpush1.bf16.msra.mxu0 %v100
    %176 = vmatprep.subr.bf16.mxu0 0
    %177 = vmatpush1.bf16.msra.mxu0 %v101
    %178 = vmatprep.subr.bf16.mxu0 0
    %179 = vmatpush1.bf16.msra.mxu0 %v102
    %180 = vmatprep.subr.bf16.mxu0 0
    %181 = vmatpush1.bf16.msra.mxu0 %v103
    %182 = vmatprep.subr.bf16.mxu0 0
    %183 = vmatpush1.bf16.msra.mxu0 %v104
    %184 = vmatprep.subr.bf16.mxu0 0
    %185 = vmatpush1.bf16.msra.mxu0 %v105
    %186 = vmatprep.subr.bf16.mxu0 0
    %187 = vmatpush1.bf16.msra.mxu0 %v106
    %188 = vmatprep.subr.bf16.mxu0 0
    %189 = vmatpush1.bf16.msra.mxu0 %v107
    %190 = vmatprep.subr.bf16.mxu0 0
    %191 = vmatpush1.bf16.msra.mxu0 0
    %192 = vmatprep.subr.bf16.mxu0 0
    %193 = vmatpush1.bf16.msra.mxu0 0
    %194 = vmatprep.subr.bf16.mxu0 0
    %195 = vmatpush1.bf16.msra.mxu0 0
    %196 = vmatprep.subr.bf16.mxu0 0
    %197 = vmatpush1.bf16.msra.mxu0 0
    %198 = vmatprep.subr.bf16.mxu0 0
    %199 = vmatpush1.bf16.msra.mxu0 0
    %200 = vmatprep.subr.bf16.mxu0 0
    %201 = vmatpush1.bf16.msra.mxu0 0
    %202 = vmatprep.subr.bf16.mxu0 0
    %203 = vmatpush1.bf16.msra.mxu0 0
    %204 = vmatprep.subr.bf16.mxu0 0
    %205 = vmatpush1.bf16.msra.mxu0 0
    %206 = vmatprep.mubr.bf16.mxu0 0
    %207 = vmatmul.mubr.bf16.gmra.mrb[0].mxu0 %v173
    %v208 = vpop.f32.mrb[0].mxu0
    %v209 = vadd.f32 0.0, %v208
    %v210 = vpop.f32.mrb[0].mxu0
    %v211 = vpop.f32.mrb[0].mxu0
    %v212 = vadd.f32 0.0, %v211
    %v213 = vpop.f32.mrb[0].mxu0
    %214 = vdwg.mxu0
    %v215 = vadd.f32 %v171, %v209
    %v216 = vadd.f32 %v172, %v212
    %217 = vst [vmem:[#allocation2] sm:$0xff] %v215
    %218 = vst [vmem:[#allocation2 + $0x8] sm:$0xff] %v216
    // Predicated region
    $region22: #{_fwd.1} parent=1 // pred_check
      %p219 = pneg %p31
    $region23: #{_fwd.1} parent=1 // pred_check_branch
      %221 = sbr.rel (%p219) target = $region25
    $region24: #{_fwd.1} parent=1 // pred_region
      %v222 = vld [vmem:[#allocation2] sm:$0xff]
      %v223 = vld [vmem:[#allocation2 + $0x8] sm:$0xff]
      %v224 = vxor.u32 %v222, 2147483648
      %v225 = vxor.u32 %v223, 2147483648
      %v226 = vmul.f32 %v224, 1.442695
      %v227 = vpow.pop %v226
      %v228 = vmul.f32 %v225, 1.442695
      %v229 = vpow.pop %v228
      %v230 = vadd.f32 %v227, 1.0
      %v231 = vadd.f32 %v229, 1.0
      %v232 = vrcp.pop %v230
      %v233 = vmul.f32 1.0, %v232
      %v234 = vrcp.pop %v231
      %v235 = vmul.f32 1.0, %v234
      %236 = vst [vmem:[%s3] sm:$0xff] %v233
      %237 = vst [vmem:[%s3 + $0x8] sm:$0xff] %v235
    $region25: #{_fwd.1} parent=1 // pred_fallthru
      _
    // Predicated region
    $region26: #{_fwd.1} parent=1 // pred_check
      _
    $region27: #{_fwd.1} parent=1 // pred_check_branch
      %239 = sbr.rel (0) target = $region29
    $region28: #{_fwd.1} parent=1 // pred_region
      _
    $region29: #{_fwd.1} parent=1 // pred_fallthru
      _
    // Predicated region
    $region30: #{_fwd.1} parent=1 // pred_check
      _
    $region31: #{_fwd.1} parent=1 // pred_check_branch
      %241 = sbr.rel (0) target = $region33
    $region32: #{_fwd.1} parent=1 // pred_region
      _
    $region33: #{_fwd.1} parent=1 // pred_fallthru
      _
    // Predicated region
    $region34: #{_fwd.1} parent=1 // pred_check
      _
    $region35: #{_fwd.1} parent=1 // pred_check_branch
      %243 = sbr.rel (0) target = $region37
    $region36: #{_fwd.1} parent=1 // pred_region
      _
    $region37: #{_fwd.1} parent=1 // pred_fallthru
      _
    // Predicated region
    $region38: #{_fwd.1} parent=1 // pred_check
      _
    $region39: #{_fwd.1} parent=1 // pred_check_branch
      %245 = sbr.rel (0) target = $region41
    $region40: #{_fwd.1} parent=1 // pred_region
      _
    $region41: #{_fwd.1} parent=1 // pred_fallthru
      _
    %246 = vsyncpa [#allocation4], 1

</llo_original>
